<compile_context>
chip_gen: v7x
topology: tpu7x:2x2x1
jax: 0.10.0
libtpu: 0.0.40
codegen_flags: <defaults>
</compile_context>

<pallas_src>
import numpy as np
import jax
import jax.numpy as jnp
from jax import lax
from jax.experimental import pallas as pl
from jax.experimental.pallas import tpu as pltpu


def global_attention_with_decay(x_nchw, Wq, Wk, Wv, rel_x, rel_y, k_param, dims):
    B, in_c, H, W = x_nchw.shape
    out_c = Wq.shape[0]
    n_head, rel_c, rel_dim, _ = rel_x.shape
    head_c = 2 * rel_c
    S = H * W
    HW = H + W
    assert H == dims and W == dims and rel_dim == 2 * dims - 1
    assert out_c == n_head * head_c

    # ---------------- glue: layout + parameter expansion (plain JAX, tiny) ----------
    # channel-major flattened sequence (B, in_c, S); pos = y*W + x (NCHW flatten)
    x_seq = x_nchw.reshape(B, in_c, S).astype(jnp.float32)

    # fused projection weight: one (3*out_c, in_c) matmul produces [q ; k ; v] rows
    w_all = jnp.concatenate([Wq, Wk, Wv], axis=0).astype(jnp.float32)

    # relative index tables: (qy - ky) + (H-1), (qx - kx) + (W-1)
    dyi = jnp.arange(H)[:, None] - jnp.arange(H)[None, :] + (H - 1)   # (qy, ky)
    dxi = jnp.arange(W)[:, None] - jnp.arange(W)[None, :] + (W - 1)   # (qx, kx)

    relx_tab = rel_x[..., 0][:, :, dyi]       # (nh, rel_c, qy, ky)
    rely_tab = rel_y[:, :, 0, :][:, :, dxi]   # (nh, rel_c, qx, kx)

    # key-major, then expand the query axis to flattened qpos on the lane axis
    relx_kq = jnp.transpose(relx_tab, (0, 1, 3, 2))   # (nh, rel_c, ky, qy)
    rely_kq = jnp.transpose(rely_tab, (0, 1, 3, 2))   # (nh, rel_c, kx, qx)
    relx_q = jnp.repeat(relx_kq, W, axis=3)           # (nh, rel_c, ky, S)   qy = qpos // W
    rely_q = jnp.tile(rely_kq, (1, 1, 1, H))          # (nh, rel_c, kx, S)   qx = qpos %  W

    # pack both halves along the key-selector axis j in [0, H+W): j<H -> ky, j>=H -> kx
    relx_pad = jnp.pad(relx_q, ((0, 0), (0, 0), (0, W), (0, 0)))
    rely_pad = jnp.pad(rely_q, ((0, 0), (0, 0), (H, 0), (0, 0)))
    rel_T = jnp.concatenate([relx_pad, rely_pad], axis=1).astype(jnp.float32)  # (nh, head_c, HW, S)

    # key-side selector (transposed): sel_T[ky(kpos), kpos] = 1 ; sel_T[H+kx(kpos), kpos] = 1
    kpos = jnp.arange(S)
    sel_T = jnp.zeros((HW, S), jnp.float32)
    sel_T = sel_T.at[kpos // W, kpos].set(1.0)
    sel_T = sel_T.at[H + kpos % W, kpos].set(1.0)

    # learned distance decay window (S, S)
    ii = jnp.arange(rel_dim) - (dims - 1)
    dec_full = jnp.maximum(jnp.abs(ii)[:, None], jnp.abs(ii)[None, :]).astype(jnp.float32)
    dec_val = 1.0 / (1.0 + jnp.abs(k_param[0])) ** dec_full
    dec_win = dec_val[dyi[:, None, :, None], dxi[None, :, None, :]].reshape(S, S)

    # ---------------- Pallas kernel: one grid step per batch element ----------------
    def _attn_kernel(x_ref, w_ref, rel_ref, sel_ref, dec_ref, out_ref):
        x = x_ref[0]                                                     # (in_c, S)
        # fused, transposed q|k|v projection; per-head slices are sublane slices
        qkv = jnp.dot(w_ref[...], x, preferred_element_type=jnp.float32)  # (3*out_c, S)
        dec = dec_ref[...]                                               # (S, S)
        sel_m = sel_ref[...]                                             # (HW, S)

        outs = []
        for h in range(n_head):                                          # static, small
            q_h = qkv[h * head_c:(h + 1) * head_c, :]                    # (head_c, S)
            k_h = qkv[out_c + h * head_c: out_c + (h + 1) * head_c, :]
            v_h = qkv[2 * out_c + h * head_c: 2 * out_c + (h + 1) * head_c, :]

            # separable relative-position bias, built transposed with sublane
            # (stride-0) broadcast FMAs:  qb[j, q] = sum_c q_h[c, q] * rel[h, c, j, q]
            qb = q_h[0:1, :] * rel_ref[h, 0]                              # (HW, S)
            for c in range(1, head_c):
                qb = qb + q_h[c:c + 1, :] * rel_ref[h, c]

            # fused content + bias matmul: single dot_general, K = head_c + HW
            a_mat = jnp.concatenate([q_h, qb], axis=0)                    # (K, S_q)
            b_mat = jnp.concatenate([k_h, sel_m], axis=0)                 # (K, S_k)
            logits = lax.dot_general(a_mat, b_mat, (((0,), (0,)), ((), ())),
                                     preferred_element_type=jnp.float32)  # (S_q, S_k)

            # learned distance decay, softmax over keys (all in exact f32)
            logits = logits * dec
            m = jnp.max(logits, axis=-1, keepdims=True)
            p = jnp.exp(logits - m)
            l = jnp.sum(p, axis=-1, keepdims=True)
            p = p * (1.0 / l)                                             # exact division

            # PV, computed transposed -> (head_c, S_q)
            outs.append(lax.dot_general(v_h, p, (((1,), (1,)), ((), ())),
                                        preferred_element_type=jnp.float32))

        # single lane-dense store of all heads: (out_c, S)
        out_ref[0] = jnp.concatenate(outs, axis=0)

    out_seq = pl.pallas_call(
        _attn_kernel,
        out_shape=jax.ShapeDtypeStruct((B, out_c, S), jnp.float32),
        grid_spec=pltpu.PrefetchScalarGridSpec(
            num_scalar_prefetch=0,
            grid=(B,),
            in_specs=[
                pl.BlockSpec((1, in_c, S), lambda b: (b, 0, 0)),
                pl.BlockSpec((3 * out_c, in_c), lambda b: (0, 0)),
                pl.BlockSpec((n_head, head_c, HW, S), lambda b: (0, 0, 0, 0)),
                pl.BlockSpec((HW, S), lambda b: (0, 0)),
                pl.BlockSpec((S, S), lambda b: (0, 0)),
            ],
            out_specs=pl.BlockSpec((1, out_c, S), lambda b: (b, 0, 0)),
        ),
        compiler_params=pltpu.CompilerParams(
            dimension_semantics=("parallel",)),
    )(x_seq, w_all, rel_T, sel_T, dec_win)

    # output already channel-major and lane-dense: (B, out_c, S) -> NCHW reshape only
    return out_seq.reshape(B, out_c, H, W)


# ---------------- numpy reference (faithful to the torch forward) ----------------
def _np_unfold(a, dim, size, step=1):
    n = (a.shape[dim] - size) // step + 1
    slabs = [np.take(a, range(s * step, s * step + size), axis=dim) for s in range(n)]
    out = np.stack(slabs, axis=dim)
    return np.moveaxis(out, dim + 1, -1)


def _numpy_reference(x, Wq, Wk, Wv, rel_x, rel_y, k_val, dims):
    B, in_c, H, W = x.shape
    n_head, rel_c, rel_dim, _ = rel_x.shape
    head_c = 2 * rel_c
    out_c = n_head * head_c
    q = np.einsum("oi,bihw->bohw", Wq, x).reshape(B, n_head, head_c, H, W)
    kk = np.einsum("oi,bihw->bohw", Wk, x).reshape(B, n_head, head_c, H, W)
    v = np.einsum("oi,bihw->bohw", Wv, x).reshape(B, n_head, head_c, H, W)

    pos = np.concatenate(
        [np.broadcast_to(rel_x, (n_head, rel_c, rel_dim, rel_dim)),
         np.broadcast_to(rel_y, (n_head, rel_c, rel_dim, rel_dim))], axis=1)
    pos = _np_unfold(_np_unfold(pos, 2, H), 3, W)[..., ::-1, ::-1]      # (nh, hc, H, W, H, W)

    kb = kk[:, :, :, None, None, :, :] + pos[None]                      # (B, nh, hc, H, W, H, W)
    qk = (q[:, :, :, :, :, None, None] * kb).sum(2)                     # (B, nh, H, W, H, W)

    i, j = np.indices((rel_dim, rel_dim)) - dims + 1
    dec_full = np.maximum(np.abs(i), np.abs(j)).astype(np.float32)
    dec = 1.0 / (1.0 + abs(float(k_val))) ** dec_full
    dec = _np_unfold(_np_unfold(dec, 0, H), 1, W)[..., ::-1, ::-1]      # (H, W, H, W)
    qk = qk * dec

    flat = qk.reshape(B, n_head, H, W, H * W)
    flat = flat - flat.max(-1, keepdims=True)
    p = np.exp(flat)
    p = p / p.sum(-1, keepdims=True)
    soft = p.reshape(B, n_head, 1, H, W, H, W)
    out = (soft * v[:, :, :, None, None, :, :]).sum((5, 6))
    return out.reshape(B, out_c, H, W)


if __name__ == "__main__":
    B, in_c, out_c, n_head, dims, k_val = 2, 4, 8, 2, 8, 0.5
    H = W = dims
    head_c = out_c // n_head
    rel_c = head_c // 2
    rel_dim = 2 * dims - 1

    key = jax.random.PRNGKey(0)
    kx, kq, kkw, kv, krx, kry = jax.random.split(key, 6)
    x = jax.random.normal(kx, (B, in_c, H, W), jnp.float32)
    Wq = jax.random.normal(kq, (out_c, in_c), jnp.float32) * 0.5
    Wk = jax.random.normal(kkw, (out_c, in_c), jnp.float32) * 0.5
    Wv = jax.random.normal(kv, (out_c, in_c), jnp.float32) * 0.5
    rel_x = jax.random.normal(krx, (n_head, rel_c, rel_dim, 1), jnp.float32)
    rel_y = jax.random.normal(kry, (n_head, rel_c, 1, rel_dim), jnp.float32)
    k_param = jnp.array([k_val], jnp.float32)

    out = global_attention_with_decay(x, Wq, Wk, Wv, rel_x, rel_y, k_param, dims)
    out = jax.block_until_ready(out)

    ref = _numpy_reference(np.asarray(x), np.asarray(Wq), np.asarray(Wk),
                           np.asarray(Wv), np.asarray(rel_x), np.asarray(rel_y),
                           k_val, dims)
    np.testing.assert_allclose(np.asarray(out), ref, rtol=2e-3, atol=2e-3)
    print("KERNEL_OK")
</pallas_src>

<mosaic_0001>
module attributes {stable_mosaic.version = 11 : i64} {
  func.func @_attn_kernel(%arg0: i32, %arg1: memref<1x4x64xf32, #tpu.memory_space<vmem>>, %arg2: memref<24x4xf32, #tpu.memory_space<vmem>>, %arg3: memref<2x4x16x64xf32, #tpu.memory_space<vmem>>, %arg4: memref<16x64xf32, #tpu.memory_space<vmem>>, %arg5: memref<64x64xf32, #tpu.memory_space<vmem>>, %arg6: memref<1x8x64xf32, #tpu.memory_space<vmem>>) attributes {dimension_semantics = [#tpu.dimension_semantics<parallel>], iteration_bounds = array<i64: 2>, scalar_prefetch = 0 : i64, scratch_operands = 0 : i64, tpu.core_type = #tpu.core_type<tc>, window_params = [{transform_indices = @transform_0, window_bounds = array<i64: 1, 4, 64>}, {pipeline_mode = #tpu.pipeline_mode<synchronous>, transform_indices = @transform_1, window_bounds = array<i64: 24, 4>}, {pipeline_mode = #tpu.pipeline_mode<synchronous>, transform_indices = @transform_2, window_bounds = array<i64: 2, 4, 16, 64>}, {pipeline_mode = #tpu.pipeline_mode<synchronous>, transform_indices = @transform_3, window_bounds = array<i64: 16, 64>}, {pipeline_mode = #tpu.pipeline_mode<synchronous>, transform_indices = @transform_4, window_bounds = array<i64: 64, 64>}, {transform_indices = @transform_5, window_bounds = array<i64: 1, 8, 64>}]} {
    %c0 = arith.constant 0 : index
    %c0_0 = arith.constant 0 : index
    %c0_1 = arith.constant 0 : index
    %0 = vector.load %arg1[%c0, %c0_0, %c0_1] : memref<1x4x64xf32, #tpu.memory_space<vmem>>, vector<1x4x64xf32>
    %1 = vector.shape_cast %0 : vector<1x4x64xf32> to vector<4x64xf32>
    %c0_2 = arith.constant 0 : index
    %c0_3 = arith.constant 0 : index
    %2 = vector.load %arg2[%c0_2, %c0_3] : memref<24x4xf32, #tpu.memory_space<vmem>>, vector<24x4xf32>
    %cst = arith.constant dense<0.000000e+00> : vector<24x64xf32>
    %3 = tpu.matmul %2, %1, %cst {dimension_numbers = #tpu.dot_dimension_numbers<[1], [0], [0], [1], [0, 0, 1, 1], [], []>} : vector<24x4xf32>, vector<4x64xf32>, vector<24x64xf32> -> vector<24x64xf32>
    %c0_4 = arith.constant 0 : index
    %c0_5 = arith.constant 0 : index
    %4 = vector.load %arg5[%c0_4, %c0_5] : memref<64x64xf32, #tpu.memory_space<vmem>>, vector<64x64xf32>
    %c0_6 = arith.constant 0 : index
    %c0_7 = arith.constant 0 : index
    %5 = vector.load %arg4[%c0_6, %c0_7] : memref<16x64xf32, #tpu.memory_space<vmem>>, vector<16x64xf32>
    %6 = vector.extract_strided_slice %3 {offsets = [0, 0], sizes = [4, 64], strides = [1, 1]} : vector<24x64xf32> to vector<4x64xf32>
    %7 = vector.extract_strided_slice %3 {offsets = [8, 0], sizes = [4, 64], strides = [1, 1]} : vector<24x64xf32> to vector<4x64xf32>
    %8 = vector.extract_strided_slice %3 {offsets = [16, 0], sizes = [4, 64], strides = [1, 1]} : vector<24x64xf32> to vector<4x64xf32>
    %9 = vector.extract_strided_slice %6 {offsets = [0, 0], sizes = [1, 64], strides = [1, 1]} : vector<4x64xf32> to vector<1x64xf32>
    %c0_8 = arith.constant 0 : index
    %c0_9 = arith.constant 0 : index
    %c0_10 = arith.constant 0 : index
    %c0_11 = arith.constant 0 : index
    %10 = vector.load %arg3[%c0_8, %c0_9, %c0_10, %c0_11] : memref<2x4x16x64xf32, #tpu.memory_space<vmem>>, vector<1x1x16x64xf32>
    %11 = vector.shape_cast %10 : vector<1x1x16x64xf32> to vector<16x64xf32>
    %12 = vector.broadcast %9 : vector<1x64xf32> to vector<16x64xf32>
    %13 = arith.mulf %12, %11 : vector<16x64xf32>
    %14 = vector.extract_strided_slice %6 {offsets = [1, 0], sizes = [1, 64], strides = [1, 1]} : vector<4x64xf32> to vector<1x64xf32>
    %c0_12 = arith.constant 0 : index
    %c1 = arith.constant 1 : index
    %c0_13 = arith.constant 0 : index
    %c0_14 = arith.constant 0 : index
    %15 = vector.load %arg3[%c0_12, %c1, %c0_13, %c0_14] : memref<2x4x16x64xf32, #tpu.memory_space<vmem>>, vector<1x1x16x64xf32>
    %16 = vector.shape_cast %15 : vector<1x1x16x64xf32> to vector<16x64xf32>
    %17 = vector.broadcast %14 : vector<1x64xf32> to vector<16x64xf32>
    %18 = arith.mulf %17, %16 : vector<16x64xf32>
    %19 = arith.addf %13, %18 : vector<16x64xf32>
    %20 = vector.extract_strided_slice %6 {offsets = [2, 0], sizes = [1, 64], strides = [1, 1]} : vector<4x64xf32> to vector<1x64xf32>
    %c0_15 = arith.constant 0 : index
    %c2 = arith.constant 2 : index
    %c0_16 = arith.constant 0 : index
    %c0_17 = arith.constant 0 : index
    %21 = vector.load %arg3[%c0_15, %c2, %c0_16, %c0_17] : memref<2x4x16x64xf32, #tpu.memory_space<vmem>>, vector<1x1x16x64xf32>
    %22 = vector.shape_cast %21 : vector<1x1x16x64xf32> to vector<16x64xf32>
    %23 = vector.broadcast %20 : vector<1x64xf32> to vector<16x64xf32>
    %24 = arith.mulf %23, %22 : vector<16x64xf32>
    %25 = arith.addf %19, %24 : vector<16x64xf32>
    %26 = vector.extract_strided_slice %6 {offsets = [3, 0], sizes = [1, 64], strides = [1, 1]} : vector<4x64xf32> to vector<1x64xf32>
    %c0_18 = arith.constant 0 : index
    %c3 = arith.constant 3 : index
    %c0_19 = arith.constant 0 : index
    %c0_20 = arith.constant 0 : index
    %27 = vector.load %arg3[%c0_18, %c3, %c0_19, %c0_20] : memref<2x4x16x64xf32, #tpu.memory_space<vmem>>, vector<1x1x16x64xf32>
    %28 = vector.shape_cast %27 : vector<1x1x16x64xf32> to vector<16x64xf32>
    %29 = vector.broadcast %26 : vector<1x64xf32> to vector<16x64xf32>
    %30 = arith.mulf %29, %28 : vector<16x64xf32>
    %31 = arith.addf %25, %30 : vector<16x64xf32>
    %32 = tpu.concatenate %6, %31 in 0 : vector<4x64xf32>, vector<16x64xf32> -> vector<20x64xf32>
    %33 = tpu.concatenate %7, %5 in 0 : vector<4x64xf32>, vector<16x64xf32> -> vector<20x64xf32>
    %cst_21 = arith.constant dense<0.000000e+00> : vector<64x64xf32>
    %34 = tpu.matmul %32, %33, %cst_21 {dimension_numbers = #tpu.dot_dimension_numbers<[0], [0], [1], [1], [0, 1, 1, 1], [], []>} : vector<20x64xf32>, vector<20x64xf32>, vector<64x64xf32> -> vector<64x64xf32>
    %35 = arith.mulf %34, %4 : vector<64x64xf32>
    %cst_22 = arith.constant dense<0xFF800000> : vector<64xf32>
    %36 = vector.multi_reduction <maximumf>, %35, %cst_22 [1] : vector<64x64xf32> to vector<64xf32>
    %37 = vector.shape_cast %36 : vector<64xf32> to vector<64x1xf32>
    %38 = vector.broadcast %37 : vector<64x1xf32> to vector<64x64xf32>
    %39 = arith.subf %35, %38 : vector<64x64xf32>
    %40 = math.exp %39 : vector<64x64xf32>
    %cst_23 = arith.constant dense<0.000000e+00> : vector<64xf32>
    %41 = vector.multi_reduction <add>, %40, %cst_23 [1] : vector<64x64xf32> to vector<64xf32>
    %42 = vector.shape_cast %41 : vector<64xf32> to vector<64x1xf32>
    %cst_24 = arith.constant 1.000000e+00 : f32
    %43 = vector.broadcast %cst_24 : f32 to vector<64x1xf32>
    %44 = arith.divf %43, %42 : vector<64x1xf32>
    %45 = vector.broadcast %44 : vector<64x1xf32> to vector<64x64xf32>
    %46 = arith.mulf %40, %45 : vector<64x64xf32>
    %cst_25 = arith.constant dense<0.000000e+00> : vector<4x64xf32>
    %47 = tpu.matmul %8, %46, %cst_25 {dimension_numbers = #tpu.dot_dimension_numbers<[1], [1], [0], [0], [0, 0, 1, 0], [], []>} : vector<4x64xf32>, vector<64x64xf32>, vector<4x64xf32> -> vector<4x64xf32>
    %48 = vector.extract_strided_slice %3 {offsets = [4, 0], sizes = [4, 64], strides = [1, 1]} : vector<24x64xf32> to vector<4x64xf32>
    %49 = vector.extract_strided_slice %3 {offsets = [12, 0], sizes = [4, 64], strides = [1, 1]} : vector<24x64xf32> to vector<4x64xf32>
    %50 = vector.extract_strided_slice %3 {offsets = [20, 0], sizes = [4, 64], strides = [1, 1]} : vector<24x64xf32> to vector<4x64xf32>
    %51 = vector.extract_strided_slice %48 {offsets = [0, 0], sizes = [1, 64], strides = [1, 1]} : vector<4x64xf32> to vector<1x64xf32>
    %c1_26 = arith.constant 1 : index
    %c0_27 = arith.constant 0 : index
    %c0_28 = arith.constant 0 : index
    %c0_29 = arith.constant 0 : index
    %52 = vector.load %arg3[%c1_26, %c0_27, %c0_28, %c0_29] : memref<2x4x16x64xf32, #tpu.memory_space<vmem>>, vector<1x1x16x64xf32>
    %53 = vector.shape_cast %52 : vector<1x1x16x64xf32> to vector<16x64xf32>
    %54 = vector.broadcast %51 : vector<1x64xf32> to vector<16x64xf32>
    %55 = arith.mulf %54, %53 : vector<16x64xf32>
    %56 = vector.extract_strided_slice %48 {offsets = [1, 0], sizes = [1, 64], strides = [1, 1]} : vector<4x64xf32> to vector<1x64xf32>
    %c1_30 = arith.constant 1 : index
    %c1_31 = arith.constant 1 : index
    %c0_32 = arith.constant 0 : index
    %c0_33 = arith.constant 0 : index
    %57 = vector.load %arg3[%c1_30, %c1_31, %c0_32, %c0_33] : memref<2x4x16x64xf32, #tpu.memory_space<vmem>>, vector<1x1x16x64xf32>
    %58 = vector.shape_cast %57 : vector<1x1x16x64xf32> to vector<16x64xf32>
    %59 = vector.broadcast %56 : vector<1x64xf32> to vector<16x64xf32>
    %60 = arith.mulf %59, %58 : vector<16x64xf32>
    %61 = arith.addf %55, %60 : vector<16x64xf32>
    %62 = vector.extract_strided_slice %48 {offsets = [2, 0], sizes = [1, 64], strides = [1, 1]} : vector<4x64xf32> to vector<1x64xf32>
    %c1_34 = arith.constant 1 : index
    %c2_35 = arith.constant 2 : index
    %c0_36 = arith.constant 0 : index
    %c0_37 = arith.constant 0 : index
    %63 = vector.load %arg3[%c1_34, %c2_35, %c0_36, %c0_37] : memref<2x4x16x64xf32, #tpu.memory_space<vmem>>, vector<1x1x16x64xf32>
    %64 = vector.shape_cast %63 : vector<1x1x16x64xf32> to vector<16x64xf32>
    %65 = vector.broadcast %62 : vector<1x64xf32> to vector<16x64xf32>
    %66 = arith.mulf %65, %64 : vector<16x64xf32>
    %67 = arith.addf %61, %66 : vector<16x64xf32>
    %68 = vector.extract_strided_slice %48 {offsets = [3, 0], sizes = [1, 64], strides = [1, 1]} : vector<4x64xf32> to vector<1x64xf32>
    %c1_38 = arith.constant 1 : index
    %c3_39 = arith.constant 3 : index
    %c0_40 = arith.constant 0 : index
    %c0_41 = arith.constant 0 : index
    %69 = vector.load %arg3[%c1_38, %c3_39, %c0_40, %c0_41] : memref<2x4x16x64xf32, #tpu.memory_space<vmem>>, vector<1x1x16x64xf32>
    %70 = vector.shape_cast %69 : vector<1x1x16x64xf32> to vector<16x64xf32>
    %71 = vector.broadcast %68 : vector<1x64xf32> to vector<16x64xf32>
    %72 = arith.mulf %71, %70 : vector<16x64xf32>
    %73 = arith.addf %67, %72 : vector<16x64xf32>
    %74 = tpu.concatenate %48, %73 in 0 : vector<4x64xf32>, vector<16x64xf32> -> vector<20x64xf32>
    %75 = tpu.concatenate %49, %5 in 0 : vector<4x64xf32>, vector<16x64xf32> -> vector<20x64xf32>
    %cst_42 = arith.constant dense<0.000000e+00> : vector<64x64xf32>
    %76 = tpu.matmul %74, %75, %cst_42 {dimension_numbers = #tpu.dot_dimension_numbers<[0], [0], [1], [1], [0, 1, 1, 1], [], []>} : vector<20x64xf32>, vector<20x64xf32>, vector<64x64xf32> -> vector<64x64xf32>
    %77 = arith.mulf %76, %4 : vector<64x64xf32>
    %cst_43 = arith.constant dense<0xFF800000> : vector<64xf32>
    %78 = vector.multi_reduction <maximumf>, %77, %cst_43 [1] : vector<64x64xf32> to vector<64xf32>
    %79 = vector.shape_cast %78 : vector<64xf32> to vector<64x1xf32>
    %80 = vector.broadcast %79 : vector<64x1xf32> to vector<64x64xf32>
    %81 = arith.subf %77, %80 : vector<64x64xf32>
    %82 = math.exp %81 : vector<64x64xf32>
    %cst_44 = arith.constant dense<0.000000e+00> : vector<64xf32>
    %83 = vector.multi_reduction <add>, %82, %cst_44 [1] : vector<64x64xf32> to vector<64xf32>
    %84 = vector.shape_cast %83 : vector<64xf32> to vector<64x1xf32>
    %cst_45 = arith.constant 1.000000e+00 : f32
    %85 = vector.broadcast %cst_45 : f32 to vector<64x1xf32>
    %86 = arith.divf %85, %84 : vector<64x1xf32>
    %87 = vector.broadcast %86 : vector<64x1xf32> to vector<64x64xf32>
    %88 = arith.mulf %82, %87 : vector<64x64xf32>
    %cst_46 = arith.constant dense<0.000000e+00> : vector<4x64xf32>
    %89 = tpu.matmul %50, %88, %cst_46 {dimension_numbers = #tpu.dot_dimension_numbers<[1], [1], [0], [0], [0, 0, 1, 0], [], []>} : vector<4x64xf32>, vector<64x64xf32>, vector<4x64xf32> -> vector<4x64xf32>
    %90 = tpu.concatenate %47, %89 in 0 : vector<4x64xf32>, vector<4x64xf32> -> vector<8x64xf32>
    %c0_47 = arith.constant 0 : index
    %c0_48 = arith.constant 0 : index
    %c0_49 = arith.constant 0 : index
    %91 = vector.load %arg6[%c0_47, %c0_48, %c0_49] : memref<1x8x64xf32, #tpu.memory_space<vmem>>, vector<1x8x64xf32>
    %92 = vector.shape_cast %91 : vector<1x8x64xf32> to vector<8x64xf32>
    %93 = vector.shape_cast %90 : vector<8x64xf32> to vector<1x8x64xf32>
    tpu.vector_store %arg6[%c0_47, %c0_48, %c0_49], %93 {strides = array<i32>} : memref<1x8x64xf32, #tpu.memory_space<vmem>>, vector<1x8x64xf32>,
    return
  }
  func.func @transform_0(%arg0: i32) -> (i32, i32, i32) {
    %c0_i32 = arith.constant 0 : i32
    %c0_i32_0 = arith.constant 0 : i32
    %c0_i32_1 = arith.constant 0 : i32
    return %arg0, %c0_i32, %c0_i32_0 : i32, i32, i32
  }
  func.func @transform_1(%arg0: i32) -> (i32, i32) {
    %c0_i32 = arith.constant 0 : i32
    %c0_i32_0 = arith.constant 0 : i32
    %c0_i32_1 = arith.constant 0 : i32
    return %c0_i32, %c0_i32_0 : i32, i32
  }
  func.func @transform_2(%arg0: i32) -> (i32, i32, i32, i32) {
    %c0_i32 = arith.constant 0 : i32
    %c0_i32_0 = arith.constant 0 : i32
    %c0_i32_1 = arith.constant 0 : i32
    %c0_i32_2 = arith.constant 0 : i32
    %c0_i32_3 = arith.constant 0 : i32
    return %c0_i32, %c0_i32_0, %c0_i32_1, %c0_i32_2 : i32, i32, i32, i32
  }
  func.func @transform_3(%arg0: i32) -> (i32, i32) {
    %c0_i32 = arith.constant 0 : i32
    %c0_i32_0 = arith.constant 0 : i32
    %c0_i32_1 = arith.constant 0 : i32
    return %c0_i32, %c0_i32_0 : i32, i32
  }
  func.func @transform_4(%arg0: i32) -> (i32, i32) {
    %c0_i32 = arith.constant 0 : i32
    %c0_i32_0 = arith.constant 0 : i32
    %c0_i32_1 = arith.constant 0 : i32
    return %c0_i32, %c0_i32_0 : i32, i32
  }
  func.func @transform_5(%arg0: i32) -> (i32, i32, i32) {
    %c0_i32 = arith.constant 0 : i32
    %c0_i32_0 = arith.constant 0 : i32
    %c0_i32_1 = arith.constant 0 : i32
    return %arg0, %c0_i32, %c0_i32_0 : i32, i32, i32
  }
}

</mosaic_0001>

<llo_original>
// kernel: tpu_custom_call.1
$region0: #{tpu_custom_call.1}
  #allocation0 [shape = 'u32[]', space=smem, size = 0x4, offset = 0x4, fixed_abs, tag = 'smem constant byte address 0x4 - core index']
  #allocation1 [shape = 'u32[144,128]{1,0:T(1,128)}', space=vmem, size = 0x12000, scoped, tag = 'internal scratch']
  %s0 = inlined_call_operand.vmem [shape: f32[2,4,64], index: 0, kind: input, shape index: {}]
  %s1 = inlined_call_operand.vmem [shape: f32[24,4], index: 1, kind: input, shape index: {}]
  %s2 = inlined_call_operand.hbm [shape: f32[2,4,16,64], index: 2, kind: input, shape index: {}]
  %s3 = inlined_call_operand.vmem [shape: f32[16,64], index: 3, kind: input, shape index: {}]
  %s4 = inlined_call_operand.hbm [shape: f32[64,64], index: 4, kind: input, shape index: {}]
  %s5 = inlined_call_operand.hbm [shape: f32[2,8,64], index: 5, kind: output, shape index: {}]
  %s6 = sld [smem:[#allocation0]]
  $region61: #{tpu_custom_call.1} parent=0
    _
  %s8 = ssub.s32 1, %s6
  %s9 = scalar_select 0, %s8, %s6
  $region1: #{tpu_custom_call.1} parent=0
    #allocation2 [shape = 'u8[65536]{0}', space=vmem, size = 0x10000, scoped, tag = 'input window, operand 2, single buffered']
    #allocation3 [shape = 's32[2]{0}', space=sflag, size = 0x8, scoped, tag = 'scoped memory for tpu_custom_call.1']
    #allocation4 [shape = 's32[2]{0}', space=sflag, size = 0x8, scoped, tag = 'scoped memory for tpu_custom_call.1']
    #allocation5 [shape = 'u8[32768]{0}', space=vmem, size = 0x8000, scoped, tag = 'input window, operand 4, single buffered']
    #allocation6 [shape = 's32[1]{0}', space=sflag, size = 0x4, scoped, tag = 'scoped memory for tpu_custom_call.1']
    #allocation7 [shape = 'u8[8192]{0}', space=vmem, size = 0x2000, scoped, tag = 'output window, operand 0']
    %10 = vsyncpa [#allocation3], 0
    %11 = vsyncpa [#allocation6], 0
    %12 = vsyncpa [#allocation4], 0
    %s13 = scalar_lea.sflag [#allocation4], 1
    %14 = vsyncpa %s13, 0
    loop: start=0, step=1, limit=4
    $region2: #{tpu_custom_call.1} parent=1 // loop_pre_header
      _
    $region3: #{tpu_custom_call.1} parent=1 // loop_header
      %s16 = sphi 0, %s20
      %p17 = scmp.ge.s32.totalorder %s16, 4
      %s26 = sphi 0, %s28
      %s29 = sphi 0, %s26
      %s30 = sphi 0, %s29
      %s46 = sphi 0, %s30
      %s50 = sphi 0, %s50
      %s52 = sphi 0, %s50
      %s53 = sphi 0, %s52
      %s67 = sphi 0, %s53
      %s71 = sphi 0, %s71
      %s73 = sphi 0, %s71
      %s74 = sphi 0, %s73
      %s88 = sphi 0, %s74
      %s92 = sphi 0, %s92
      %s94 = sphi 0, %s92
      %s95 = sphi 0, %s94
      %s109 = sphi 0, %s95
      %s113 = sphi 0, %s113
      %s115 = sphi 0, %s113
      %s116 = sphi 0, %s115
      %s130 = sphi 0, %s116
      %s136 = sphi 0, %s138
      %s139 = sphi 0, %s136
      %s140 = sphi 0, %s139
      %s156 = sphi 0, %s140
    $region4: #{tpu_custom_call.1} parent=1 // loop_header_branch
      %19 = sbr.rel (%p17) target = $region8
    $region5: #{tpu_custom_call.1} parent=1 // loop_body
      %s21 = ssub.s32 %s16, 1
      %s22 = ssub.s32 %s16, 2
      %s23 = sadd.s32 %s16, 1
      %s24 = ssub.s32 %s16, %s23
      %p25 = scmp.eq.s32.totalorder %s24, 0
      %s27 = sadd.s32 %s26, 1
      %s28 = scalar_select %p25, %s26, %s27
      %p31 = pneg %p25
      %p32 = scmp.eq.s32.totalorder %s16, 1
      %p33 = por %p31, %p32
      %p34 = scmp.ne.s32.totalorder %s26, %s29
      %p35 = scmp.eq.s32.totalorder %s16, 0
      %p36 = por %p34, %p35
      %p37 = scmp.ne.s32.totalorder %s26, %s29
      %p38 = scmp.eq.s32.totalorder %s21, 1
      %p39 = por %p37, %p38
      %p40 = scmp.ne.s32.totalorder %s29, %s30
      %p41 = scmp.eq.s32.totalorder %s21, 0
      %p42 = por %p40, %p41
      %p43 = scmp.ne.s32.totalorder %s29, %s30
      %p44 = scmp.eq.s32.totalorder %s22, 1
      %p45 = por %p43, %p44
      %p47 = scmp.ne.s32.totalorder %s30, %s46
      %p48 = scmp.eq.s32.totalorder %s22, 0
      %p49 = por %p47, %p48
      %s51 = sadd.s32 %s50, 1
      %p54 = scmp.eq.s32.totalorder %s16, 1
      %p55 = scmp.ne.s32.totalorder %s50, %s52
      %p56 = scmp.eq.s32.totalorder %s16, 0
      %p57 = por %p55, %p56
      %p58 = scmp.ne.s32.totalorder %s50, %s52
      %p59 = scmp.eq.s32.totalorder %s21, 1
      %p60 = por %p58, %p59
      %p61 = scmp.ne.s32.totalorder %s52, %s53
      %p62 = scmp.eq.s32.totalorder %s21, 0
      %p63 = por %p61, %p62
      %p64 = scmp.ne.s32.totalorder %s52, %s53
      %p65 = scmp.eq.s32.totalorder %s22, 1
      %p66 = por %p64, %p65
      %p68 = scmp.ne.s32.totalorder %s53, %s67
      %p69 = scmp.eq.s32.totalorder %s22, 0
      %p70 = por %p68, %p69
      %s72 = sadd.s32 %s71, 1
      %p75 = scmp.eq.s32.totalorder %s16, 1
      %p76 = scmp.ne.s32.totalorder %s71, %s73
      %p77 = scmp.eq.s32.totalorder %s16, 0
      %p78 = por %p76, %p77
      %p79 = scmp.ne.s32.totalorder %s71, %s73
      %p80 = scmp.eq.s32.totalorder %s21, 1
      %p81 = por %p79, %p80
      %p82 = scmp.ne.s32.totalorder %s73, %s74
      %p83 = scmp.eq.s32.totalorder %s21, 0
      %p84 = por %p82, %p83
      %p85 = scmp.ne.s32.totalorder %s73, %s74
      %p86 = scmp.eq.s32.totalorder %s22, 1
      %p87 = por %p85, %p86
      %p89 = scmp.ne.s32.totalorder %s74, %s88
      %p90 = scmp.eq.s32.totalorder %s22, 0
      %p91 = por %p89, %p90
      %s93 = sadd.s32 %s92, 1
      %p96 = scmp.eq.s32.totalorder %s16, 1
      %p97 = scmp.ne.s32.totalorder %s92, %s94
      %p98 = scmp.eq.s32.totalorder %s16, 0
      %p99 = por %p97, %p98
      %p100 = scmp.ne.s32.totalorder %s92, %s94
      %p101 = scmp.eq.s32.totalorder %s21, 1
      %p102 = por %p100, %p101
      %p103 = scmp.ne.s32.totalorder %s94, %s95
      %p104 = scmp.eq.s32.totalorder %s21, 0
      %p105 = por %p103, %p104
      %p106 = scmp.ne.s32.totalorder %s94, %s95
      %p107 = scmp.eq.s32.totalorder %s22, 1
      %p108 = por %p106, %p107
      %p110 = scmp.ne.s32.totalorder %s95, %s109
      %p111 = scmp.eq.s32.totalorder %s22, 0
      %p112 = por %p110, %p111
      %s114 = sadd.s32 %s113, 1
      %p117 = scmp.eq.s32.totalorder %s16, 1
      %p118 = scmp.ne.s32.totalorder %s113, %s115
      %p119 = scmp.eq.s32.totalorder %s16, 0
      %p120 = por %p118, %p119
      %p121 = scmp.ne.s32.totalorder %s113, %s115
      %p122 = scmp.eq.s32.totalorder %s21, 1
      %p123 = por %p121, %p122
      %p124 = scmp.ne.s32.totalorder %s115, %s116
      %p125 = scmp.eq.s32.totalorder %s21, 0
      %p126 = por %p124, %p125
      %p127 = scmp.ne.s32.totalorder %s115, %s116
      %p128 = scmp.eq.s32.totalorder %s22, 1
      %p129 = por %p127, %p128
      %p131 = scmp.ne.s32.totalorder %s116, %s130
      %p132 = scmp.eq.s32.totalorder %s22, 0
      %p133 = por %p131, %p132
      %s134 = ssub.s32 %s16, %s23
      %p135 = scmp.eq.s32.totalorder %s134, 0
      %s137 = sadd.s32 %s136, 1
      %s138 = scalar_select %p135, %s136, %s137
      %p141 = pneg %p135
      %p142 = scmp.eq.s32.totalorder %s16, 1
      %p143 = por %p141, %p142
      %p144 = scmp.ne.s32.totalorder %s136, %s139
      %p145 = scmp.eq.s32.totalorder %s16, 0
      %p146 = por %p144, %p145
      %p147 = scmp.ne.s32.totalorder %s136, %s139
      %p148 = scmp.eq.s32.totalorder %s21, 1
      %p149 = por %p147, %p148
      %p150 = scmp.ne.s32.totalorder %s139, %s140
      %p151 = scmp.eq.s32.totalorder %s21, 0
      %p152 = por %p150, %p151
      %p153 = scmp.ne.s32.totalorder %s139, %s140
      %p154 = scmp.eq.s32.totalorder %s22, 1
      %p155 = por %p153, %p154
      %p157 = scmp.ne.s32.totalorder %s140, %s156
      %p158 = scmp.eq.s32.totalorder %s22, 0
      %p159 = por %p157, %p158
      %p160 = scmp.le.s32.totalorder 1, %s16
      %p161 = scmp.lt.s32.totalorder %s16, 3
      %p162 = pnand %p160, %p161
      %p163 = pneg %p162
      // Predicated region
      $region9: #{tpu_custom_call.1} parent=5 // pred_check
        _
      $region10: #{tpu_custom_call.1} parent=5 // pred_check_branch
        %165 = sbr.rel (%p162) target = $region12
      $region11: #{tpu_custom_call.1} parent=5 // pred_region
        %s166 = ssub.s32 %s16, 1
        // Predicated region
        $region13: #{tpu_custom_call.1} parent=11 // pred_check
          %p167 = pneg %p63
        $region14: #{tpu_custom_call.1} parent=11 // pred_check_branch
          %169 = sbr.rel (%p167) target = $region16
        $region15: #{tpu_custom_call.1} parent=11 // pred_region
          _
        $region16: #{tpu_custom_call.1} parent=11 // pred_fallthru
          _
        // Predicated region
        $region17: #{tpu_custom_call.1} parent=11 // pred_check
          %p170 = pneg %p84
        $region18: #{tpu_custom_call.1} parent=11 // pred_check_branch
          %172 = sbr.rel (%p170) target = $region20
        $region19: #{tpu_custom_call.1} parent=11 // pred_region
          %s174 = ssub.s32 2048, 2048
          %175 = vsyncadd [#allocation3], %s174
          %s176 = sshll.u32 [#allocation2], 4
          %s177 = int_to_ptr.vmem [resolvable:$true] %s176
          %182 = dma.hbm_to_vmem [thread:$0]  %s2, 2048, %s177, [#allocation3], 128, 128, 8
        $region20: #{tpu_custom_call.1} parent=11 // pred_fallthru
          _
        // Predicated region
        $region21: #{tpu_custom_call.1} parent=11 // pred_check
          %p183 = pneg %p105
        $region22: #{tpu_custom_call.1} parent=11 // pred_check_branch
          %185 = sbr.rel (%p183) target = $region24
        $region23: #{tpu_custom_call.1} parent=11 // pred_region
          _
        $region24: #{tpu_custom_call.1} parent=11 // pred_fallthru
          _
        // Predicated region
        $region25: #{tpu_custom_call.1} parent=11 // pred_check
          %p186 = pneg %p126
        $region26: #{tpu_custom_call.1} parent=11 // pred_check_branch
          %188 = sbr.rel (%p186) target = $region28
        $region27: #{tpu_custom_call.1} parent=11 // pred_region
          %s190 = ssub.s32 1024, 1024
          %191 = vsyncadd [#allocation6], %s190
          %s192 = sshll.u32 [#allocation5], 4
          %s193 = int_to_ptr.vmem [resolvable:$true] %s192
          %198 = dma.hbm_to_vmem [thread:$0]  %s4, 1024, %s193, [#allocation6], 128, 128, 8
        $region28: #{tpu_custom_call.1} parent=11 // pred_fallthru
          _
      $region12: #{tpu_custom_call.1} parent=5 // pred_fallthru
        _
      %p199 = scmp.lt.s32.totalorder %s16, 2
      // Predicated region
      $region29: #{tpu_custom_call.1} parent=5 // pred_check
        %p200 = pneg %p199
      $region30: #{tpu_custom_call.1} parent=5 // pred_check_branch
        %202 = sbr.rel (%p200) target = $region32
      $region31: #{tpu_custom_call.1} parent=5 // pred_region
        // Predicated region
        $region33: #{tpu_custom_call.1} parent=31 // pred_check
          %p203 = pneg %p36
        $region34: #{tpu_custom_call.1} parent=31 // pred_check_branch
          %205 = sbr.rel (%p203) target = $region36
        $region35: #{tpu_custom_call.1} parent=31 // pred_region
          %p206 = scmp.lt.s32.totalorder %s16, 1
          %s207 = scalar_select %p206, %s16, 1
          %s208 = smul.addr %s207, 4
          %s209 = scalar_lea.vmem %s0, %s208
        $region36: #{tpu_custom_call.1} parent=31 // pred_fallthru
          _
      $region32: #{tpu_custom_call.1} parent=5 // pred_fallthru
        _
      %p210 = scmp.le.s32.totalorder 1, %s16
      %p211 = scmp.lt.s32.totalorder %s16, 3
      %p212 = pnand %p210, %p211
      %p213 = pneg %p212
      // Predicated region
      $region37: #{tpu_custom_call.1} parent=5 // pred_check
        _
      $region38: #{tpu_custom_call.1} parent=5 // pred_check_branch
        %215 = sbr.rel (%p212) target = $region40
      $region39: #{tpu_custom_call.1} parent=5 // pred_region
        %s216 = ssub.s32 %s16, 1
        // Predicated region
        $region41: #{tpu_custom_call.1} parent=39 // pred_check
          %p217 = pneg %p84
        $region42: #{tpu_custom_call.1} parent=39 // pred_check_branch
          %219 = sbr.rel (%p217) target = $region44
        $region43: #{tpu_custom_call.1} parent=39 // pred_region
          %220 = dma.done [#allocation3], 2048
        $region44: #{tpu_custom_call.1} parent=39 // pred_fallthru
          _
        // Predicated region
        $region45: #{tpu_custom_call.1} parent=39 // pred_check
          %p221 = pneg %p126
        $region46: #{tpu_custom_call.1} parent=39 // pred_check_branch
          %223 = sbr.rel (%p221) target = $region48
        $region47: #{tpu_custom_call.1} parent=39 // pred_region
          %224 = dma.done [#allocation6], 1024
        $region48: #{tpu_custom_call.1} parent=39 // pred_fallthru
          _
        %p225 = scmp.lt.s32.totalorder %s21, 1
        %s226 = scalar_select %p225, %s21, 1
        %s227 = smul.addr %s226, 4
        %s228 = scalar_lea.vmem %s0, %s227
        %p229 = pneg %p42
        %p230 = pneg %p39
        %p231 = pneg %p63
        %p232 = pneg %p60
        %p233 = pneg %p84
        %p234 = pneg %p81
        %p235 = pneg %p105
        %p236 = pneg %p102
        %p237 = pneg %p126
        %p238 = pneg %p123
        %p239 = pneg %p152
        %p240 = pneg %p149
        %s241 = sand.u32 %s139, 1
        %s242 = scalar_lea.sflag [#allocation4], %s241
        %s243 = sand.u32 %s139, 1
        %s244 = smul.addr %s243, 8
        %s245 = scalar_lea.vmem [#allocation7], %s244
        %p246 = scmp.lt.s32.totalorder %s21, 1
        %s247 = scalar_select %p246, %s21, 1
        %s248 = smul.addr %s247, 4
        %s249 = scalar_lea.vmem %s0, %s248
        %v250 = vld [vmem:[%s249] sm:$0xf]
        %v251 = vld [vmem:[%s1] sm:$0xff]
        %v252 = vld [vmem:[%s1 + $0x8] sm:$0xff]
        %v253 = vld [vmem:[%s1 + $0x10] sm:$0xff]
        %vm254 = vcmask 31744
        %v256 = vsel %vm254, %v251, 0
        %v259 = vsel %vm254, %v252, 0
        %v262 = vsel %vm254, %v253, 0
        %vm264 = vcmask 1043456
        %v266 = vsel %vm264, %v250, 0
        %268 = vmatprep.subr.mxu0 0.0
        %269 = vmatpush1.msra.mxu0 %v266
        %270 = vmatprep.subr.mxu0 0.0
        %271 = vmatpush1.msra.mxu0 0.0
        %272 = vmatprep.subr.mxu0 0.0
        %273 = vmatpush1.msra.mxu0 0.0
        %274 = vmatprep.subr.mxu0 0.0
        %275 = vmatpush1.msra.mxu0 0.0
        %276 = vmatprep.subr.mxu0 0.0
        %277 = vmatpush1.msra.mxu0 0.0
        %278 = vmatprep.subr.mxu0 0.0
        %279 = vmatpush1.msra.mxu0 0.0
        %280 = vmatprep.subr.mxu0 0.0
        %281 = vmatpush1.msra.mxu0 0.0
        %282 = vmatprep.subr.mxu0 0.0
        %283 = vmatpush1.msra.mxu0 0.0
        %284 = vmatprep.subr.mxu0 0.0
        %285 = vmatpush1.msra.mxu0 0.0
        %286 = vmatprep.subr.mxu0 0.0
        %287 = vmatpush1.msra.mxu0 0.0
        %288 = vmatprep.subr.mxu0 0.0
        %289 = vmatpush1.msra.mxu0 0.0
        %290 = vmatprep.subr.mxu0 0.0
        %291 = vmatpush1.msra.mxu0 0.0
        %292 = vmatprep.subr.mxu0 0.0
        %293 = vmatpush1.msra.mxu0 0.0
        %294 = vmatprep.subr.mxu0 0.0
        %295 = vmatpush1.msra.mxu0 0.0
        %296 = vmatprep.subr.mxu0 0.0
        %297 = vmatpush1.msra.mxu0 0.0
        %298 = vmatprep.subr.mxu0 0.0
        %299 = vmatpush1.msra.mxu0 0.0
        %300 = vmatprep.subr.mxu0 0.0
        %301 = vmatpush1.msra.mxu0 0.0
        %302 = vmatprep.subr.mxu0 0.0
        %303 = vmatpush1.msra.mxu0 0.0
        %304 = vmatprep.subr.mxu0 0.0
        %305 = vmatpush1.msra.mxu0 0.0
        %306 = vmatprep.subr.mxu0 0.0
        %307 = vmatpush1.msra.mxu0 0.0
        %308 = vmatprep.subr.mxu0 0.0
        %309 = vmatpush1.msra.mxu0 0.0
        %310 = vmatprep.subr.mxu0 0.0
        %311 = vmatpush1.msra.mxu0 0.0
        %312 = vmatprep.subr.mxu0 0.0
        %313 = vmatpush1.msra.mxu0 0.0
        %314 = vmatprep.subr.mxu0 0.0
        %315 = vmatpush1.msra.mxu0 0.0
        %316 = vmatprep.subr.mxu0 0.0
        %317 = vmatpush1.msra.mxu0 0.0
        %318 = vmatprep.subr.mxu0 0.0
        %319 = vmatpush1.msra.mxu0 0.0
        %320 = vmatprep.subr.mxu0 0.0
        %321 = vmatpush1.msra.mxu0 0.0
        %322 = vmatprep.subr.mxu0 0.0
        %323 = vmatpush1.msra.mxu0 0.0
        %324 = vmatprep.subr.mxu0 0.0
        %325 = vmatpush1.msra.mxu0 0.0
        %326 = vmatprep.subr.mxu0 0.0
        %327 = vmatpush1.msra.mxu0 0.0
        %328 = vmatprep.subr.mxu0 0.0
        %329 = vmatpush1.msra.mxu0 0.0
        %330 = vmatprep.subr.mxu0 0.0
        %331 = vmatpush1.msra.mxu0 0.0
        %332 = vmatprep.mubr.f32.mxu0 0.0
        %333 = vmatmul.mubr.f32.gmra.mrb[0].mxu0 %v256
        %v334 = vpop.f32.mrb[0].mxu0
        %v335 = vadd.f32 0.0, %v334
        %v336 = vpop.f32.mrb[0].mxu0
        %337 = vmatprep.mubr.f32.mxu0 0.0
        %338 = vmatmul.mubr.f32.gmra.mrb[0].mxu0 %v259
        %v339 = vpop.f32.mrb[0].mxu0
        %v340 = vadd.f32 0.0, %v339
        %v341 = vpop.f32.mrb[0].mxu0
        %342 = vmatprep.mubr.f32.mxu0 0.0
        %343 = vmatmul.mubr.f32.gmra.mrb[0].mxu0 %v262
        %v344 = vpop.f32.mrb[0].mxu0
        %v345 = vadd.f32 0.0, %v344
        %v346 = vpop.f32.mrb[0].mxu0
        %347 = vdwg.mxu0
        %v348 = vld [vmem:[#allocation5] sm:$0xff]
        %v349 = vld [vmem:[#allocation5 + $0x8] sm:$0xff]
        %v350 = vld [vmem:[#allocation5 + $0x10] sm:$0xff]
        %v351 = vld [vmem:[#allocation5 + $0x18] sm:$0xff]
        %v352 = vld [vmem:[#allocation5 + $0x20] sm:$0xff]
        %v353 = vld [vmem:[#allocation5 + $0x28] sm:$0xff]
        %v354 = vld [vmem:[#allocation5 + $0x30] sm:$0xff]
        %v355 = vld [vmem:[#allocation5 + $0x38] sm:$0xff]
        %v356 = vld [vmem:[%s3] sm:$0xff]
        %v357 = vld [vmem:[%s3 + $0x8] sm:$0xff]
        %v358 = vld [vmem:[#allocation2] sm:$0xff]
        %v359 = vld [vmem:[#allocation2 + $0x8] sm:$0xff]
        %v360 = vlaneseq
        %v361 = vshrl.u32 %v360, 7
        %v362 = vsub.s32 0, %v361
        %v363 = vrot.slane %v335, %v362
        %v364 = vmul.f32 %v363, %v358
        %v365 = vmul.f32 %v363, %v359
        %s366 = scalar_lea.vmem [#allocation2], 16
        %v367 = vld [vmem:[%s366] sm:$0xff]
        %v368 = vld [vmem:[%s366 + $0x8] sm:$0xff]
        %v369 = vlaneseq
        %v370 = vshrl.u32 %v369, 7
        %v371 = vsub.s32 1, %v370
        %v372 = vrot.slane %v335, %v371
        %v373 = vmul.f32 %v372, %v367
        %v374 = vmul.f32 %v372, %v368
        %v375 = vadd.f32 %v364, %v373
        %v376 = vadd.f32 %v365, %v374
        %s377 = scalar_lea.vmem [#allocation2], 32
        %v378 = vld [vmem:[%s377] sm:$0xff]
        %v379 = vld [vmem:[%s377 + $0x8] sm:$0xff]
        %v380 = vlaneseq
        %v381 = vshrl.u32 %v380, 7
        %v382 = vsub.s32 2, %v381
        %v383 = vrot.slane %v335, %v382
        %v384 = vmul.f32 %v383, %v378
        %v385 = vmul.f32 %v383, %v379
        %v386 = vadd.f32 %v375, %v384
        %v387 = vadd.f32 %v376, %v385
        %s388 = scalar_lea.vmem [#allocation2], 48
        %v389 = vld [vmem:[%s388] sm:$0xff]
        %v390 = vld [vmem:[%s388 + $0x8] sm:$0xff]
        %v391 = vlaneseq
        %v392 = vshrl.u32 %v391, 7
        %v393 = vsub.s32 3, %v392
        %v394 = vrot.slane %v335, %v393
        %v395 = vmul.f32 %v394, %v389
        %v396 = vmul.f32 %v394, %v390
        %v397 = vadd.f32 %v386, %v395
        %v398 = vadd.f32 %v387, %v396
        %v401 = vrot.slane %v397, 4
        %v402 = vrot.slane %v398, 4
        %v403 = vsel %vm264, %v401, %v402
        %v407 = vsel %vm264, %v335, %v401
        %v410 = vrot.slane %v356, 4
        %v411 = vrot.slane %v357, 4
        %v412 = vsel %vm264, %v410, %v411
        %v415 = vsel %vm264, %v340, %v410
        %416 = vxpose.xlu0.b32.start [1/16] %v407, 128
        %417 = vxpose.xlu0.b32.cont [2/16] %v403, 128
        %418 = vxpose.xlu0.b32.cont [3/16] %v402, 128
        %419 = vxpose.xlu0.b32.cont [4/16] 0.0, 128
        %420 = vxpose.xlu0.b32.cont [5/16] 0.0, 128
        %421 = vxpose.xlu0.b32.cont [6/16] 0.0, 128
        %422 = vxpose.xlu0.b32.cont [7/16] 0.0, 128
        %423 = vxpose.xlu0.b32.cont [8/16] 0.0, 128
        %424 = vxpose.xlu0.b32.cont [9/16] 0.0, 128
        %425 = vxpose.xlu0.b32.cont [10/16] 0.0, 128
        %426 = vxpose.xlu0.b32.cont [11/16] 0.0, 128
        %427 = vxpose.xlu0.b32.cont [12/16] 0.0, 128
        %428 = vxpose.xlu0.b32.cont [13/16] 0.0, 128
        %429 = vxpose.xlu0.b32.cont [14/16] 0.0, 128
        %430 = vxpose.xlu0.b32.cont [15/16] 0.0, 128
        %431 = vxpose.xlu0.b32.end [16/16] 0.0, 128
        %v432 = vpop.trf.xlu0
        %v433 = vpop.trf.xlu0
        %v434 = vpop.trf.xlu0
        %v435 = vpop.trf.xlu0
        %v436 = vpop.trf.xlu0
        %v437 = vpop.trf.xlu0
        %v438 = vpop.trf.xlu0
        %v439 = vpop.trf.xlu0
        %v440 = vpop.trf.xlu0
        %v441 = vpop.trf.xlu0
        %v442 = vpop.trf.xlu0
        %v443 = vpop.trf.xlu0
        %v444 = vpop.trf.xlu0
        %v445 = vpop.trf.xlu0
        %v446 = vpop.trf.xlu0
        %v447 = vpop.trf.xlu0
        %vm448 = vcmask 162816
        %v450 = vsel %vm448, %v432, 0
        %v453 = vsel %vm448, %v433, 0
        %v456 = vsel %vm448, %v434, 0
        %v459 = vsel %vm448, %v435, 0
        %v462 = vsel %vm448, %v436, 0
        %v465 = vsel %vm448, %v437, 0
        %v468 = vsel %vm448, %v438, 0
        %v471 = vsel %vm448, %v439, 0
        %v473 = vsel %vm264, %v411, 0
        %475 = vmatprep.subr.mxu0 0.0
        %476 = vmatpush1.msra.mxu0 %v415
        %477 = vmatprep.subr.mxu0 0.0
        %478 = vmatpush1.msra.mxu0 %v412
        %479 = vmatprep.subr.mxu0 0.0
        %480 = vmatpush1.msra.mxu0 %v473
        %481 = vmatprep.subr.mxu0 0.0
        %482 = vmatpush1.msra.mxu0 0.0
        %483 = vmatprep.subr.mxu0 0.0
        %484 = vmatpush1.msra.mxu0 0.0
        %485 = vmatprep.subr.mxu0 0.0
        %486 = vmatpush1.msra.mxu0 0.0
        %487 = vmatprep.subr.mxu0 0.0
        %488 = vmatpush1.msra.mxu0 0.0
        %489 = vmatprep.subr.mxu0 0.0
        %490 = vmatpush1.msra.mxu0 0.0
        %491 = vmatprep.subr.mxu0 0.0
        %492 = vmatpush1.msra.mxu0 0.0
        %493 = vmatprep.subr.mxu0 0.0
        %494 = vmatpush1.msra.mxu0 0.0
        %495 = vmatprep.subr.mxu0 0.0
        %496 = vmatpush1.msra.mxu0 0.0
        %497 = vmatprep.subr.mxu0 0.0
        %498 = vmatpush1.msra.mxu0 0.0
        %499 = vmatprep.subr.mxu0 0.0
        %500 = vmatpush1.msra.mxu0 0.0
        %501 = vmatprep.subr.mxu0 0.0
        %502 = vmatpush1.msra.mxu0 0.0
        %503 = vmatprep.subr.mxu0 0.0
        %504 = vmatpush1.msra.mxu0 0.0
        %505 = vmatprep.subr.mxu0 0.0
        %506 = vmatpush1.msra.mxu0 0.0
        %507 = vmatprep.subr.mxu0 0.0
        %508 = vmatpush1.msra.mxu0 0.0
        %509 = vmatprep.subr.mxu0 0.0
        %510 = vmatpush1.msra.mxu0 0.0
        %511 = vmatprep.subr.mxu0 0.0
        %512 = vmatpush1.msra.mxu0 0.0
        %513 = vmatprep.subr.mxu0 0.0
        %514 = vmatpush1.msra.mxu0 0.0
        %515 = vmatprep.subr.mxu0 0.0
        %516 = vmatpush1.msra.mxu0 0.0
        %517 = vmatprep.subr.mxu0 0.0
        %518 = vmatpush1.msra.mxu0 0.0
        %519 = vmatprep.subr.mxu0 0.0
        %520 = vmatpush1.msra.mxu0 0.0
        %521 = vmatprep.subr.mxu0 0.0
        %522 = vmatpush1.msra.mxu0 0.0
        %523 = vmatprep.subr.mxu0 0.0
        %524 = vmatpush1.msra.mxu0 0.0
        %525 = vmatprep.subr.mxu0 0.0
        %526 = vmatpush1.msra.mxu0 0.0
        %527 = vmatprep.subr.mxu0 0.0
        %528 = vmatpush1.msra.mxu0 0.0
        %529 = vmatprep.subr.mxu0 0.0
        %530 = vmatpush1.msra.mxu0 0.0
        %531 = vmatprep.subr.mxu0 0.0
        %532 = vmatpush1.msra.mxu0 0.0
        %533 = vmatprep.subr.mxu0 0.0
        %534 = vmatpush1.msra.mxu0 0.0
        %535 = vmatprep.subr.mxu0 0.0
        %536 = vmatpush1.msra.mxu0 0.0
        %537 = vmatprep.subr.mxu0 0.0
        %538 = vmatpush1.msra.mxu0 0.0
        %539 = vmatprep.mubr.f32.mxu0 0.0
        %540 = vmatmul.mubr.f32.gmra.mrb[0].mxu0 %v450
        %v541 = vpop.f32.mrb[0].mxu0
        %v542 = vadd.f32 0.0, %v541
        %v543 = vpop.f32.mrb[0].mxu0
        %544 = vmatprep.mubr.f32.mxu0 0.0
        %545 = vmatmul.mubr.f32.gmra.mrb[0].mxu0 %v453
        %v546 = vpop.f32.mrb[0].mxu0
        %v547 = vadd.f32 0.0, %v546
        %v548 = vpop.f32.mrb[0].mxu0
        %549 = vmatprep.mubr.f32.mxu0 0.0
        %550 = vmatmul.mubr.f32.gmra.mrb[0].mxu0 %v456
        %v551 = vpop.f32.mrb[0].mxu0
        %v552 = vadd.f32 0.0, %v551
        %v553 = vpop.f32.mrb[0].mxu0
        %554 = vmatprep.mubr.f32.mxu0 0.0
        %555 = vmatmul.mubr.f32.gmra.mrb[0].mxu0 %v459
        %v556 = vpop.f32.mrb[0].mxu0
        %v557 = vadd.f32 0.0, %v556
        %v558 = vpop.f32.mrb[0].mxu0
        %559 = vmatprep.mubr.f32.mxu0 0.0
        %560 = vmatmul.mubr.f32.gmra.mrb[0].mxu0 %v462
        %v561 = vpop.f32.mrb[0].mxu0
        %v562 = vadd.f32 0.0, %v561
        %v563 = vpop.f32.mrb[0].mxu0
        %564 = vmatprep.mubr.f32.mxu0 0.0
        %565 = vmatmul.mubr.f32.gmra.mrb[0].mxu0 %v465
        %v566 = vpop.f32.mrb[0].mxu0
        %v567 = vadd.f32 0.0, %v566
        %v568 = vpop.f32.mrb[0].mxu0
        %569 = vmatprep.mubr.f32.mxu0 0.0
        %570 = vmatmul.mubr.f32.gmra.mrb[0].mxu0 %v468
        %v571 = vpop.f32.mrb[0].mxu0
        %v572 = vadd.f32 0.0, %v571
        %v573 = vpop.f32.mrb[0].mxu0
        %574 = vmatprep.mubr.f32.mxu0 0.0
        %575 = vmatmul.mubr.f32.gmra.mrb[0].mxu0 %v471
        %v576 = vpop.f32.mrb[0].mxu0
        %v577 = vadd.f32 0.0, %v576
        %v578 = vpop.f32.mrb[0].mxu0
        %579 = vdwg.mxu0
        %v580 = vmul.f32 %v542, %v348
        %v581 = vmul.f32 %v547, %v349
        %v582 = vmul.f32 %v552, %v350
        %v583 = vmul.f32 %v557, %v351
        %v584 = vmul.f32 %v562, %v352
        %v585 = vmul.f32 %v567, %v353
        %v586 = vmul.f32 %v572, %v354
        %v587 = vmul.f32 %v577, %v355
        %vm588 = vcmask 523264
        %v589 = vsel %vm588, %v580, -inf
        %590 = vmax.xlane.f32.xlu0 %v589
        %v591 = vpop.xlane.xlu0 %590
        %v592 = vsel %vm588, %v581, -inf
        %593 = vmax.xlane.f32.xlu0 %v592
        %v594 = vpop.xlane.xlu0 %593
        %v595 = vsel %vm588, %v582, -inf
        %596 = vmax.xlane.f32.xlu0 %v595
        %v597 = vpop.xlane.xlu0 %596
        %v598 = vsel %vm588, %v583, -inf
        %599 = vmax.xlane.f32.xlu0 %v598
        %v600 = vpop.xlane.xlu0 %599
        %v601 = vsel %vm588, %v584, -inf
        %602 = vmax.xlane.f32.xlu0 %v601
        %v603 = vpop.xlane.xlu0 %602
        %v604 = vsel %vm588, %v585, -inf
        %605 = vmax.xlane.f32.xlu0 %v604
        %v606 = vpop.xlane.xlu0 %605
        %v607 = vsel %vm588, %v586, -inf
        %608 = vmax.xlane.f32.xlu0 %v607
        %v609 = vpop.xlane.xlu0 %608
        %v610 = vsel %vm588, %v587, -inf
        %611 = vmax.xlane.f32.xlu0 %v610
        %v612 = vpop.xlane.xlu0 %611
        %v613 = vsub.f32 %v580, %v591
        %v614 = vsub.f32 %v581, %v594
        %v615 = vsub.f32 %v582, %v597
        %v616 = vsub.f32 %v583, %v600
        %v617 = vsub.f32 %v584, %v603
        %v618 = vsub.f32 %v585, %v606
        %v619 = vsub.f32 %v586, %v609
        %v620 = vsub.f32 %v587, %v612
        %v621 = vmul.f32 %v613, 1.442695
        %v622 = vpow.pop %v621
        %v623 = vmul.f32 %v614, 1.442695
        %v624 = vpow.pop %v623
        %v625 = vmul.f32 %v615, 1.442695
        %v626 = vpow.pop %v625
        %v627 = vmul.f32 %v616, 1.442695
        %v628 = vpow.pop %v627
        %v629 = vmul.f32 %v617, 1.442695
        %v630 = vpow.pop %v629
        %v631 = vmul.f32 %v618, 1.442695
        %v632 = vpow.pop %v631
        %v633 = vmul.f32 %v619, 1.442695
        %v634 = vpow.pop %v633
        %v635 = vmul.f32 %v620, 1.442695
        %v636 = vpow.pop %v635
        %v637 = vsel %vm588, %v622, 0.0
        %638 = vadd.xlane.f32.xlu0 %v637
        %v639 = vpop.xlane.xlu0 %638
        %v640 = vsel %vm588, %v624, 0.0
        %641 = vadd.xlane.f32.xlu0 %v640
        %v642 = vpop.xlane.xlu0 %641
        %v643 = vsel %vm588, %v626, 0.0
        %644 = vadd.xlane.f32.xlu0 %v643
        %v645 = vpop.xlane.xlu0 %644
        %v646 = vsel %vm588, %v628, 0.0
        %647 = vadd.xlane.f32.xlu0 %v646
        %v648 = vpop.xlane.xlu0 %647
        %v649 = vsel %vm588, %v630, 0.0
        %650 = vadd.xlane.f32.xlu0 %v649
        %v651 = vpop.xlane.xlu0 %650
        %v652 = vsel %vm588, %v632, 0.0
        %653 = vadd.xlane.f32.xlu0 %v652
        %v654 = vpop.xlane.xlu0 %653
        %v655 = vsel %vm588, %v634, 0.0
        %656 = vadd.xlane.f32.xlu0 %v655
        %v657 = vpop.xlane.xlu0 %656
        %v658 = vsel %vm588, %v636, 0.0
        %659 = vadd.xlane.f32.xlu0 %v658
        %v660 = vpop.xlane.xlu0 %659
        %v661 = vrcp.pop %v639
        %v662 = vmul.f32 1.0, %v661
        %v663 = vrcp.pop %v642
        %v664 = vmul.f32 1.0, %v663
        %v665 = vrcp.pop %v645
        %v666 = vmul.f32 1.0, %v665
        %v667 = vrcp.pop %v648
        %v668 = vmul.f32 1.0, %v667
        %v669 = vrcp.pop %v651
        %v670 = vmul.f32 1.0, %v669
        %v671 = vrcp.pop %v654
        %v672 = vmul.f32 1.0, %v671
        %v673 = vrcp.pop %v657
        %v674 = vmul.f32 1.0, %v673
        %v675 = vrcp.pop %v660
        %v676 = vmul.f32 1.0, %v675
        %v677 = vmul.f32 %v622, %v662
        %v678 = vmul.f32 %v624, %v664
        %v679 = vmul.f32 %v626, %v666
        %v680 = vmul.f32 %v628, %v668
        %v681 = vmul.f32 %v630, %v670
        %v682 = vmul.f32 %v632, %v672
        %v683 = vmul.f32 %v634, %v674
        %v684 = vmul.f32 %v636, %v676
        %v686 = vsel %vm588, %v345, 0
        %v689 = vsel %vm588, %v677, 0
        %v692 = vsel %vm588, %v678, 0
        %v695 = vsel %vm588, %v679, 0
        %v698 = vsel %vm588, %v680, 0
        %v701 = vsel %vm588, %v681, 0
        %v704 = vsel %vm588, %v682, 0
        %v707 = vsel %vm588, %v683, 0
        %v710 = vsel %vm588, %v684, 0
        %712 = vmatprep.subr.mxu0 0.0
        %713 = vmatpush1.xpose.msra.mxu0 %v689
        %714 = vmatprep.subr.mxu0 0.0
        %715 = vmatpush1.xpose.msra.mxu0 %v692
        %716 = vmatprep.subr.mxu0 0.0
        %717 = vmatpush1.xpose.msra.mxu0 %v695
        %718 = vmatprep.subr.mxu0 0.0
        %719 = vmatpush1.xpose.msra.mxu0 %v698
        %720 = vmatprep.subr.mxu0 0.0
        %721 = vmatpush1.xpose.msra.mxu0 %v701
        %722 = vmatprep.subr.mxu0 0.0
        %723 = vmatpush1.xpose.msra.mxu0 %v704
        %724 = vmatprep.subr.mxu0 0.0
        %725 = vmatpush1.xpose.msra.mxu0 %v707
        %726 = vmatprep.subr.mxu0 0.0
        %727 = vmatpush1.xpose.msra.mxu0 %v710
        %728 = vmatprep.subr.mxu0 0.0
        %729 = vmatpush1.xpose.msra.mxu0 0.0
        %730 = vmatprep.subr.mxu0 0.0
        %731 = vmatpush1.xpose.msra.mxu0 0.0
        %732 = vmatprep.subr.mxu0 0.0
        %733 = vmatpush1.xpose.msra.mxu0 0.0
        %734 = vmatprep.subr.mxu0 0.0
        %735 = vmatpush1.xpose.msra.mxu0 0.0
        %736 = vmatprep.subr.mxu0 0.0
        %737 = vmatpush1.xpose.msra.mxu0 0.0
        %738 = vmatprep.subr.mxu0 0.0
        %739 = vmatpush1.xpose.msra.mxu0 0.0
        %740 = vmatprep.subr.mxu0 0.0
        %741 = vmatpush1.xpose.msra.mxu0 0.0
        %742 = vmatprep.subr.mxu0 0.0
        %743 = vmatpush1.xpose.msra.mxu0 0.0
        %744 = vmatprep.subr.mxu0 0.0
        %745 = vmatpush1.xpose.msra.mxu0 0.0
        %746 = vmatprep.subr.mxu0 0.0
        %747 = vmatpush1.xpose.msra.mxu0 0.0
        %748 = vmatprep.subr.mxu0 0.0
        %749 = vmatpush1.xpose.msra.mxu0 0.0
        %750 = vmatprep.subr.mxu0 0.0
        %751 = vmatpush1.xpose.msra.mxu0 0.0
        %752 = vmatprep.subr.mxu0 0.0
        %753 = vmatpush1.xpose.msra.mxu0 0.0
        %754 = vmatprep.subr.mxu0 0.0
        %755 = vmatpush1.xpose.msra.mxu0 0.0
        %756 = vmatprep.subr.mxu0 0.0
        %757 = vmatpush1.xpose.msra.mxu0 0.0
        %758 = vmatprep.subr.mxu0 0.0
        %759 = vmatpush1.xpose.msra.mxu0 0.0
        %760 = vmatprep.subr.mxu0 0.0
        %761 = vmatpush1.xpose.msra.mxu0 0.0
        %762 = vmatprep.subr.mxu0 0.0
        %763 = vmatpush1.xpose.msra.mxu0 0.0
        %764 = vmatprep.subr.mxu0 0.0
        %765 = vmatpush1.xpose.msra.mxu0 0.0
        %766 = vmatprep.subr.mxu0 0.0
        %767 = vmatpush1.xpose.msra.mxu0 0.0
        %768 = vmatprep.subr.mxu0 0.0
        %769 = vmatpush1.xpose.msra.mxu0 0.0
        %770 = vmatprep.subr.mxu0 0.0
        %771 = vmatpush1.xpose.msra.mxu0 0.0
        %772 = vmatprep.subr.mxu0 0.0
        %773 = vmatpush1.xpose.msra.mxu0 0.0
        %774 = vmatprep.subr.mxu0 0.0
        %775 = vmatpush1.xpose.msra.mxu0 0.0
        %776 = vmatprep.mubr.f32.mxu0 0.0
        %777 = vmatmul.mubr.f32.gmra.mrb[0].mxu0 %v686
        %v778 = vpop.f32.mrb[0].mxu0
        %v779 = vadd.f32 0.0, %v778
        %v780 = vpop.f32.mrb[0].mxu0
        %781 = vdwg.mxu0
        %s782 = scalar_lea.vmem [#allocation2], 64
        %v783 = vld [vmem:[%s782] sm:$0xff]
        %v784 = vld [vmem:[%s782 + $0x8] sm:$0xff]
        %v785 = vlaneseq
        %v786 = vshrl.u32 %v785, 7
        %v787 = vsub.s32 4, %v786
        %v788 = vrot.slane %v335, %v787
        %v789 = vmul.f32 %v788, %v783
        %v790 = vmul.f32 %v788, %v784
        %s791 = scalar_lea.vmem [#allocation2], 80
        %v792 = vld [vmem:[%s791] sm:$0xff]
        %v793 = vld [vmem:[%s791 + $0x8] sm:$0xff]
        %v794 = vlaneseq
        %v795 = vshrl.u32 %v794, 7
        %v796 = vsub.s32 5, %v795
        %v797 = vrot.slane %v335, %v796
        %v798 = vmul.f32 %v797, %v792
        %v799 = vmul.f32 %v797, %v793
        %v800 = vadd.f32 %v789, %v798
        %v801 = vadd.f32 %v790, %v799
        %s802 = scalar_lea.vmem [#allocation2], 96
        %v803 = vld [vmem:[%s802] sm:$0xff]
        %v804 = vld [vmem:[%s802 + $0x8] sm:$0xff]
        %v805 = vlaneseq
        %v806 = vshrl.u32 %v805, 7
        %v807 = vsub.s32 6, %v806
        %v808 = vrot.slane %v335, %v807
        %v809 = vmul.f32 %v808, %v803
        %v810 = vmul.f32 %v808, %v804
        %v811 = vadd.f32 %v800, %v809
        %v812 = vadd.f32 %v801, %v810
        %s813 = scalar_lea.vmem [#allocation2], 112
        %v814 = vld [vmem:[%s813] sm:$0xff]
        %v815 = vld [vmem:[%s813 + $0x8] sm:$0xff]
        %v816 = vlaneseq
        %v817 = vshrl.u32 %v816, 7
        %v818 = vsub.s32 7, %v817
        %v819 = vrot.slane %v335, %v818
        %v820 = vmul.f32 %v819, %v814
        %v821 = vmul.f32 %v819, %v815
        %v822 = vadd.f32 %v811, %v820
        %v823 = vadd.f32 %v812, %v821
        %v825 = vrot.slane %v335, 4
        %v829 = vrot.slane %v822, 4
        %v830 = vrot.slane %v823, 4
        %v831 = vsel %vm264, %v829, %v830
        %v835 = vsel %vm264, %v825, %v829
        %v837 = vrot.slane %v340, 4
        %v839 = vsel %vm264, %v837, %v410
        %840 = vxpose.xlu0.b32.start [1/16] %v835, 128
        %841 = vxpose.xlu0.b32.cont [2/16] %v831, 128
        %842 = vxpose.xlu0.b32.cont [3/16] %v830, 128
        %843 = vxpose.xlu0.b32.cont [4/16] 0.0, 128
        %844 = vxpose.xlu0.b32.cont [5/16] 0.0, 128
        %845 = vxpose.xlu0.b32.cont [6/16] 0.0, 128
        %846 = vxpose.xlu0.b32.cont [7/16] 0.0, 128
        %847 = vxpose.xlu0.b32.cont [8/16] 0.0, 128
        %848 = vxpose.xlu0.b32.cont [9/16] 0.0, 128
        %849 = vxpose.xlu0.b32.cont [10/16] 0.0, 128
        %850 = vxpose.xlu0.b32.cont [11/16] 0.0, 128
        %851 = vxpose.xlu0.b32.cont [12/16] 0.0, 128
        %852 = vxpose.xlu0.b32.cont [13/16] 0.0, 128
        %853 = vxpose.xlu0.b32.cont [14/16] 0.0, 128
        %854 = vxpose.xlu0.b32.cont [15/16] 0.0, 128
        %855 = vxpose.xlu0.b32.end [16/16] 0.0, 128
        %v856 = vpop.trf.xlu0
        %v857 = vpop.trf.xlu0
        %v858 = vpop.trf.xlu0
        %v859 = vpop.trf.xlu0
        %v860 = vpop.trf.xlu0
        %v861 = vpop.trf.xlu0
        %v862 = vpop.trf.xlu0
        %v863 = vpop.trf.xlu0
        %v864 = vpop.trf.xlu0
        %v865 = vpop.trf.xlu0
        %v866 = vpop.trf.xlu0
        %v867 = vpop.trf.xlu0
        %v868 = vpop.trf.xlu0
        %v869 = vpop.trf.xlu0
        %v870 = vpop.trf.xlu0
        %v871 = vpop.trf.xlu0
        %v873 = vsel %vm448, %v856, 0
        %v876 = vsel %vm448, %v857, 0
        %v879 = vsel %vm448, %v858, 0
        %v882 = vsel %vm448, %v859, 0
        %v885 = vsel %vm448, %v860, 0
        %v888 = vsel %vm448, %v861, 0
        %v891 = vsel %vm448, %v862, 0
        %v894 = vsel %vm448, %v863, 0
        %896 = vmatprep.subr.mxu0 0.0
        %897 = vmatpush1.msra.mxu0 %v839
        %898 = vmatprep.subr.mxu0 0.0
        %899 = vmatpush1.msra.mxu0 %v412
        %900 = vmatprep.subr.mxu0 0.0
        %901 = vmatpush1.msra.mxu0 %v473
        %902 = vmatprep.subr.mxu0 0.0
        %903 = vmatpush1.msra.mxu0 0.0
        %904 = vmatprep.subr.mxu0 0.0
        %905 = vmatpush1.msra.mxu0 0.0
        %906 = vmatprep.subr.mxu0 0.0
        %907 = vmatpush1.msra.mxu0 0.0
        %908 = vmatprep.subr.mxu0 0.0
        %909 = vmatpush1.msra.mxu0 0.0
        %910 = vmatprep.subr.mxu0 0.0
        %911 = vmatpush1.msra.mxu0 0.0
        %912 = vmatprep.subr.mxu0 0.0
        %913 = vmatpush1.msra.mxu0 0.0
        %914 = vmatprep.subr.mxu0 0.0
        %915 = vmatpush1.msra.mxu0 0.0
        %916 = vmatprep.subr.mxu0 0.0
        %917 = vmatpush1.msra.mxu0 0.0
        %918 = vmatprep.subr.mxu0 0.0
        %919 = vmatpush1.msra.mxu0 0.0
        %920 = vmatprep.subr.mxu0 0.0
        %921 = vmatpush1.msra.mxu0 0.0
        %922 = vmatprep.subr.mxu0 0.0
        %923 = vmatpush1.msra.mxu0 0.0
        %924 = vmatprep.subr.mxu0 0.0
        %925 = vmatpush1.msra.mxu0 0.0
        %926 = vmatprep.subr.mxu0 0.0
        %927 = vmatpush1.msra.mxu0 0.0
        %928 = vmatprep.subr.mxu0 0.0
        %929 = vmatpush1.msra.mxu0 0.0
        %930 = vmatprep.subr.mxu0 0.0
        %931 = vmatpush1.msra.mxu0 0.0
        %932 = vmatprep.subr.mxu0 0.0
        %933 = vmatpush1.msra.mxu0 0.0
        %934 = vmatprep.subr.mxu0 0.0
        %935 = vmatpush1.msra.mxu0 0.0
        %936 = vmatprep.subr.mxu0 0.0
        %937 = vmatpush1.msra.mxu0 0.0
        %938 = vmatprep.subr.mxu0 0.0
        %939 = vmatpush1.msra.mxu0 0.0
        %940 = vmatprep.subr.mxu0 0.0
        %941 = vmatpush1.msra.mxu0 0.0
        %942 = vmatprep.subr.mxu0 0.0
        %943 = vmatpush1.msra.mxu0 0.0
        %944 = vmatprep.subr.mxu0 0.0
        %945 = vmatpush1.msra.mxu0 0.0
        %946 = vmatprep.subr.mxu0 0.0
        %947 = vmatpush1.msra.mxu0 0.0
        %948 = vmatprep.subr.mxu0 0.0
        %949 = vmatpush1.msra.mxu0 0.0
        %950 = vmatprep.subr.mxu0 0.0
        %951 = vmatpush1.msra.mxu0 0.0
        %952 = vmatprep.subr.mxu0 0.0
        %953 = vmatpush1.msra.mxu0 0.0
        %954 = vmatprep.subr.mxu0 0.0
        %955 = vmatpush1.msra.mxu0 0.0
        %956 = vmatprep.subr.mxu0 0.0
        %957 = vmatpush1.msra.mxu0 0.0
        %958 = vmatprep.subr.mxu0 0.0
        %959 = vmatpush1.msra.mxu0 0.0
        %960 = vmatprep.mubr.f32.mxu0 0.0
        %961 = vmatmul.mubr.f32.gmra.mrb[0].mxu0 %v873
        %v962 = vpop.f32.mrb[0].mxu0
        %v963 = vadd.f32 0.0, %v962
        %v964 = vpop.f32.mrb[0].mxu0
        %965 = vmatprep.mubr.f32.mxu0 0.0
        %966 = vmatmul.mubr.f32.gmra.mrb[0].mxu0 %v876
        %v967 = vpop.f32.mrb[0].mxu0
        %v968 = vadd.f32 0.0, %v967
        %v969 = vpop.f32.mrb[0].mxu0
        %970 = vmatprep.mubr.f32.mxu0 0.0
        %971 = vmatmul.mubr.f32.gmra.mrb[0].mxu0 %v879
        %v972 = vpop.f32.mrb[0].mxu0
        %v973 = vadd.f32 0.0, %v972
        %v974 = vpop.f32.mrb[0].mxu0
        %975 = vmatprep.mubr.f32.mxu0 0.0
        %976 = vmatmul.mubr.f32.gmra.mrb[0].mxu0 %v882
        %v977 = vpop.f32.mrb[0].mxu0
        %v978 = vadd.f32 0.0, %v977
        %v979 = vpop.f32.mrb[0].mxu0
        %980 = vmatprep.mubr.f32.mxu0 0.0
        %981 = vmatmul.mubr.f32.gmra.mrb[0].mxu0 %v885
        %v982 = vpop.f32.mrb[0].mxu0
        %v983 = vadd.f32 0.0, %v982
        %v984 = vpop.f32.mrb[0].mxu0
        %985 = vmatprep.mubr.f32.mxu0 0.0
        %986 = vmatmul.mubr.f32.gmra.mrb[0].mxu0 %v888
        %v987 = vpop.f32.mrb[0].mxu0
        %v988 = vadd.f32 0.0, %v987
        %v989 = vpop.f32.mrb[0].mxu0
        %990 = vmatprep.mubr.f32.mxu0 0.0
        %991 = vmatmul.mubr.f32.gmra.mrb[0].mxu0 %v891
        %v992 = vpop.f32.mrb[0].mxu0
        %v993 = vadd.f32 0.0, %v992
        %v994 = vpop.f32.mrb[0].mxu0
        %995 = vmatprep.mubr.f32.mxu0 0.0
        %996 = vmatmul.mubr.f32.gmra.mrb[0].mxu0 %v894
        %v997 = vpop.f32.mrb[0].mxu0
        %v998 = vadd.f32 0.0, %v997
        %v999 = vpop.f32.mrb[0].mxu0
        %1000 = vdwg.mxu0
        %v1001 = vmul.f32 %v963, %v348
        %v1002 = vmul.f32 %v968, %v349
        %v1003 = vmul.f32 %v973, %v350
        %v1004 = vmul.f32 %v978, %v351
        %v1005 = vmul.f32 %v983, %v352
        %v1006 = vmul.f32 %v988, %v353
        %v1007 = vmul.f32 %v993, %v354
        %v1008 = vmul.f32 %v998, %v355
        %v1009 = vsel %vm588, %v1001, -inf
        %1010 = vmax.xlane.f32.xlu0 %v1009
        %v1011 = vpop.xlane.xlu0 %1010
        %v1012 = vsel %vm588, %v1002, -inf
        %1013 = vmax.xlane.f32.xlu0 %v1012
        %v1014 = vpop.xlane.xlu0 %1013
        %v1015 = vsel %vm588, %v1003, -inf
        %1016 = vmax.xlane.f32.xlu0 %v1015
        %v1017 = vpop.xlane.xlu0 %1016
        %v1018 = vsel %vm588, %v1004, -inf
        %1019 = vmax.xlane.f32.xlu0 %v1018
        %v1020 = vpop.xlane.xlu0 %1019
        %v1021 = vsel %vm588, %v1005, -inf
        %1022 = vmax.xlane.f32.xlu0 %v1021
        %v1023 = vpop.xlane.xlu0 %1022
        %v1024 = vsel %vm588, %v1006, -inf
        %1025 = vmax.xlane.f32.xlu0 %v1024
        %v1026 = vpop.xlane.xlu0 %1025
        %v1027 = vsel %vm588, %v1007, -inf
        %1028 = vmax.xlane.f32.xlu0 %v1027
        %v1029 = vpop.xlane.xlu0 %1028
        %v1030 = vsel %vm588, %v1008, -inf
        %1031 = vmax.xlane.f32.xlu0 %v1030
        %v1032 = vpop.xlane.xlu0 %1031
        %v1033 = vsub.f32 %v1001, %v1011
        %v1034 = vsub.f32 %v1002, %v1014
        %v1035 = vsub.f32 %v1003, %v1017
        %v1036 = vsub.f32 %v1004, %v1020
        %v1037 = vsub.f32 %v1005, %v1023
        %v1038 = vsub.f32 %v1006, %v1026
        %v1039 = vsub.f32 %v1007, %v1029
        %v1040 = vsub.f32 %v1008, %v1032
        %v1041 = vmul.f32 %v1033, 1.442695
        %v1042 = vpow.pop %v1041
        %v1043 = vmul.f32 %v1034, 1.442695
        %v1044 = vpow.pop %v1043
        %v1045 = vmul.f32 %v1035, 1.442695
        %v1046 = vpow.pop %v1045
        %v1047 = vmul.f32 %v1036, 1.442695
        %v1048 = vpow.pop %v1047
        %v1049 = vmul.f32 %v1037, 1.442695
        %v1050 = vpow.pop %v1049
        %v1051 = vmul.f32 %v1038, 1.442695
        %v1052 = vpow.pop %v1051
        %v1053 = vmul.f32 %v1039, 1.442695
        %v1054 = vpow.pop %v1053
        %v1055 = vmul.f32 %v1040, 1.442695
        %v1056 = vpow.pop %v1055
        %v1057 = vsel %vm588, %v1042, 0.0
        %1058 = vadd.xlane.f32.xlu0 %v1057
        %v1059 = vpop.xlane.xlu0 %1058
        %v1060 = vsel %vm588, %v1044, 0.0
        %1061 = vadd.xlane.f32.xlu0 %v1060
        %v1062 = vpop.xlane.xlu0 %1061
        %v1063 = vsel %vm588, %v1046, 0.0
        %1064 = vadd.xlane.f32.xlu0 %v1063
        %v1065 = vpop.xlane.xlu0 %1064
        %v1066 = vsel %vm588, %v1048, 0.0
        %1067 = vadd.xlane.f32.xlu0 %v1066
        %v1068 = vpop.xlane.xlu0 %1067
        %v1069 = vsel %vm588, %v1050, 0.0
        %1070 = vadd.xlane.f32.xlu0 %v1069
        %v1071 = vpop.xlane.xlu0 %1070
        %v1072 = vsel %vm588, %v1052, 0.0
        %1073 = vadd.xlane.f32.xlu0 %v1072
        %v1074 = vpop.xlane.xlu0 %1073
        %v1075 = vsel %vm588, %v1054, 0.0
        %1076 = vadd.xlane.f32.xlu0 %v1075
        %v1077 = vpop.xlane.xlu0 %1076
        %v1078 = vsel %vm588, %v1056, 0.0
        %1079 = vadd.xlane.f32.xlu0 %v1078
        %v1080 = vpop.xlane.xlu0 %1079
        %v1081 = vrcp.pop %v1059
        %v1082 = vmul.f32 1.0, %v1081
        %v1083 = vrcp.pop %v1062
        %v1084 = vmul.f32 1.0, %v1083
        %v1085 = vrcp.pop %v1065
        %v1086 = vmul.f32 1.0, %v1085
        %v1087 = vrcp.pop %v1068
        %v1088 = vmul.f32 1.0, %v1087
        %v1089 = vrcp.pop %v1071
        %v1090 = vmul.f32 1.0, %v1089
        %v1091 = vrcp.pop %v1074
        %v1092 = vmul.f32 1.0, %v1091
        %v1093 = vrcp.pop %v1077
        %v1094 = vmul.f32 1.0, %v1093
        %v1095 = vrcp.pop %v1080
        %v1096 = vmul.f32 1.0, %v1095
        %v1097 = vmul.f32 %v1042, %v1082
        %v1098 = vmul.f32 %v1044, %v1084
        %v1099 = vmul.f32 %v1046, %v1086
        %v1100 = vmul.f32 %v1048, %v1088
        %v1101 = vmul.f32 %v1050, %v1090
        %v1102 = vmul.f32 %v1052, %v1092
        %v1103 = vmul.f32 %v1054, %v1094
        %v1104 = vmul.f32 %v1056, %v1096
        %v1105 = vrot.slane %v345, 4
        %v1106 = vsel %vm588, %v1105, 0
        %v1109 = vsel %vm588, %v1097, 0
        %v1112 = vsel %vm588, %v1098, 0
        %v1115 = vsel %vm588, %v1099, 0
        %v1118 = vsel %vm588, %v1100, 0
        %v1121 = vsel %vm588, %v1101, 0
        %v1124 = vsel %vm588, %v1102, 0
        %v1127 = vsel %vm588, %v1103, 0
        %v1130 = vsel %vm588, %v1104, 0
        %1132 = vmatprep.subr.mxu0 0.0
        %1133 = vmatpush1.xpose.msra.mxu0 %v1109
        %1134 = vmatprep.subr.mxu0 0.0
        %1135 = vmatpush1.xpose.msra.mxu0 %v1112
        %1136 = vmatprep.subr.mxu0 0.0
        %1137 = vmatpush1.xpose.msra.mxu0 %v1115
        %1138 = vmatprep.subr.mxu0 0.0
        %1139 = vmatpush1.xpose.msra.mxu0 %v1118
        %1140 = vmatprep.subr.mxu0 0.0
        %1141 = vmatpush1.xpose.msra.mxu0 %v1121
        %1142 = vmatprep.subr.mxu0 0.0
        %1143 = vmatpush1.xpose.msra.mxu0 %v1124
        %1144 = vmatprep.subr.mxu0 0.0
        %1145 = vmatpush1.xpose.msra.mxu0 %v1127
        %1146 = vmatprep.subr.mxu0 0.0
        %1147 = vmatpush1.xpose.msra.mxu0 %v1130
        %1148 = vmatprep.subr.mxu0 0.0
        %1149 = vmatpush1.xpose.msra.mxu0 0.0
        %1150 = vmatprep.subr.mxu0 0.0
        %1151 = vmatpush1.xpose.msra.mxu0 0.0
        %1152 = vmatprep.subr.mxu0 0.0
        %1153 = vmatpush1.xpose.msra.mxu0 0.0
        %1154 = vmatprep.subr.mxu0 0.0
        %1155 = vmatpush1.xpose.msra.mxu0 0.0
        %1156 = vmatprep.subr.mxu0 0.0
        %1157 = vmatpush1.xpose.msra.mxu0 0.0
        %1158 = vmatprep.subr.mxu0 0.0
        %1159 = vmatpush1.xpose.msra.mxu0 0.0
        %1160 = vmatprep.subr.mxu0 0.0
        %1161 = vmatpush1.xpose.msra.mxu0 0.0
        %1162 = vmatprep.subr.mxu0 0.0
        %1163 = vmatpush1.xpose.msra.mxu0 0.0
        %1164 = vmatprep.subr.mxu0 0.0
        %1165 = vmatpush1.xpose.msra.mxu0 0.0
        %1166 = vmatprep.subr.mxu0 0.0
        %1167 = vmatpush1.xpose.msra.mxu0 0.0
        %1168 = vmatprep.subr.mxu0 0.0
        %1169 = vmatpush1.xpose.msra.mxu0 0.0
        %1170 = vmatprep.subr.mxu0 0.0
        %1171 = vmatpush1.xpose.msra.mxu0 0.0
        %1172 = vmatprep.subr.mxu0 0.0
        %1173 = vmatpush1.xpose.msra.mxu0 0.0
        %1174 = vmatprep.subr.mxu0 0.0
        %1175 = vmatpush1.xpose.msra.mxu0 0.0
        %1176 = vmatprep.subr.mxu0 0.0
        %1177 = vmatpush1.xpose.msra.mxu0 0.0
        %1178 = vmatprep.subr.mxu0 0.0
        %1179 = vmatpush1.xpose.msra.mxu0 0.0
        %1180 = vmatprep.subr.mxu0 0.0
        %1181 = vmatpush1.xpose.msra.mxu0 0.0
        %1182 = vmatprep.subr.mxu0 0.0
        %1183 = vmatpush1.xpose.msra.mxu0 0.0
        %1184 = vmatprep.subr.mxu0 0.0
        %1185 = vmatpush1.xpose.msra.mxu0 0.0
        %1186 = vmatprep.subr.mxu0 0.0
        %1187 = vmatpush1.xpose.msra.mxu0 0.0
        %1188 = vmatprep.subr.mxu0 0.0
        %1189 = vmatpush1.xpose.msra.mxu0 0.0
        %1190 = vmatprep.subr.mxu0 0.0
        %1191 = vmatpush1.xpose.msra.mxu0 0.0
        %1192 = vmatprep.subr.mxu0 0.0
        %1193 = vmatpush1.xpose.msra.mxu0 0.0
        %1194 = vmatprep.subr.mxu0 0.0
        %1195 = vmatpush1.xpose.msra.mxu0 0.0
        %1196 = vmatprep.mubr.f32.mxu0 0.0
        %1197 = vmatmul.mubr.f32.gmra.mrb[0].mxu0 %v1106
        %v1198 = vpop.f32.mrb[0].mxu0
        %v1199 = vadd.f32 0.0, %v1198
        %v1200 = vpop.f32.mrb[0].mxu0
        %1201 = vdwg.mxu0
        %v1203 = vrot.slane %v1199, 4
        %v1205 = vsel %vm264, %v779, %v1203
        %1206 = vst.msk [vmem:[%s245] sm:$0xff] %vm588, %v1205
        %s1207 = sand.u32 %s139, 1
        %s1208 = scalar_lea.sflag [#allocation4], %s1207
        %s1209 = sand.u32 %s139, 1
        %s1210 = smul.addr %s1209, 8
        %s1211 = scalar_lea.vmem [#allocation7], %s1210
        // Predicated region
        $region49: #{tpu_custom_call.1} parent=39 // pred_check
          %p1212 = pneg %p149
        $region50: #{tpu_custom_call.1} parent=39 // pred_check_branch
          %1214 = sbr.rel (%p1212) target = $region52
        $region51: #{tpu_custom_call.1} parent=39 // pred_region
          %s1216 = ssub.s32 128, 128
          %1217 = vsyncadd %s1208, %s1216
          %s1218 = smul.addr %s21, 128
          %s1219 = scalar_lea.hbm %s5, %s1218
          %s1221 = sshll.u32 %s1211, 4
          %s1222 = int_to_ptr.vmem [resolvable:$true] %s1221
          %1224 = dma.vmem_to_hbm [thread:$0]  %s1222, 128, %s1219, %s1208
        $region52: #{tpu_custom_call.1} parent=39 // pred_fallthru
          _
      $region40: #{tpu_custom_call.1} parent=5 // pred_fallthru
        _
      %p1225 = scmp.le.s32.totalorder 2, %s16
      // Predicated region
      $region53: #{tpu_custom_call.1} parent=5 // pred_check
        %p1226 = pneg %p1225
      $region54: #{tpu_custom_call.1} parent=5 // pred_check_branch
        %1228 = sbr.rel (%p1226) target = $region56
      $region55: #{tpu_custom_call.1} parent=5 // pred_region
        %s1229 = ssub.s32 %s16, 2
        // Predicated region
        $region57: #{tpu_custom_call.1} parent=55 // pred_check
          %p1230 = pneg %p155
        $region58: #{tpu_custom_call.1} parent=55 // pred_check_branch
          %1232 = sbr.rel (%p1230) target = $region60
        $region59: #{tpu_custom_call.1} parent=55 // pred_region
          %s1233 = sand.u32 %s140, 1
          %s1234 = scalar_lea.sflag [#allocation4], %s1233
          %s1235 = sand.u32 %s140, 1
          %s1236 = smul.addr %s1235, 8
          %s1237 = scalar_lea.vmem [#allocation7], %s1236
          %1238 = dma.done %s1234, 128
        $region60: #{tpu_custom_call.1} parent=55 // pred_fallthru
          _
      $region56: #{tpu_custom_call.1} parent=5 // pred_fallthru
        _
    $region6: #{tpu_custom_call.1} parent=1 // loop_footer
      %s20 = sadd.s32 1, %s16
    $region7: #{tpu_custom_call.1} parent=1 // loop_footer_branch
      %15 = sbr.rel target = $region3
    $region8: #{tpu_custom_call.1} parent=1 // loop_exit
      _
    %1239 = vsyncpa [#allocation3], 1
    %s1240 = scalar_lea.sflag [#allocation3], 1
    %1241 = vsyncpa %s1240, 1
    %1242 = vsyncpa [#allocation6], 1
    %1243 = vsyncpa [#allocation4], 1
    %s1244 = scalar_lea.sflag [#allocation4], 1
    %1245 = vsyncpa %s1244, 1

</llo_original>
